<compile_context>
chip_gen: v5e
topology: v5e:2x2
jax: 0.10.0
libtpu: 0.0.40
codegen_flags: <defaults>
</compile_context>

<pallas_src>
import functools

import jax
import jax.numpy as jnp
from jax import lax
from jax.experimental import pallas as pl
from jax.experimental.pallas import tpu as pltpu

# Finite stand-in for -inf: exp() underflows to exactly 0.0 in f32, no NaN hazard.
_NEG_BIG = -1e30


def _round_up(x, m):
    return ((x + m - 1) // m) * m


def _pick_row_tile(Cp, itemsize):
    """Largest row tile (<= 256, MXU-friendly on v6e/v7x) whose per-step VMEM
    footprint fits the smallest-VMEM generation (v7x: 64 MiB) with headroom."""
    budget = 32 * 1024 * 1024
    tile = 256
    while tile > 8:
        inputs = 4 * 2 * tile * Cp * itemsize        # 4 input tiles, double-buffered
        scratch = 2 * tile * Cp * 4 + 4 * tile * 4   # acc_s/acc_t + m/l online state
        temps = 8 * tile * tile * 4                  # scores/exp temporaries (estimate)
        if inputs + scratch + temps <= budget:
            break
        tile //= 2
    return tile


def _dis_kernel(qs_ref, qt_ref, ks_ref, kt_ref, out_ref,
                m_s, l_s, acc_s, m_t, l_t, acc_t,
                *, T, alpha, n_rows, n_cols, padded_rows, bf16_matmul):
    i = pl.program_id(0)
    j = pl.program_id(1)
    nj = pl.num_programs(1)

    TM, Cp = qs_ref.shape
    TK = ks_ref.shape[0]
    mm_dtype = jnp.bfloat16 if bf16_matmul else qs_ref.dtype
    mask_rows = padded_rows != n_rows    # static: batch dim was zero-padded
    mask_cols = Cp != n_cols             # static: class dim was zero-padded

    # ---- init online-softmax state at the first kv step --------------------
    @pl.when(j == 0)
    def _():
        m_s[...] = jnp.full_like(m_s, _NEG_BIG)
        m_t[...] = jnp.full_like(m_t, _NEG_BIG)
        l_s[...] = jnp.zeros_like(l_s)
        l_t[...] = jnp.zeros_like(l_t)
        acc_s[...] = jnp.zeros_like(acc_s)
        acc_t[...] = jnp.zeros_like(acc_t)

    # Padded kv rows get a huge-negative score so their softmax weight is 0.
    if mask_rows:
        kv_col = lax.broadcasted_iota(jnp.int32, (1, TK), 1)
        kv_valid = (j * TK + kv_col) < n_rows          # (1, TK)

    def online_update(q_ref, kv_ref, m_ref, l_ref, acc_ref):
        # bf16 MXU operands, f32 accumulation; elementwise math stays f32.
        q = q_ref[...].astype(mm_dtype)
        kv = kv_ref[...].astype(mm_dtype)
        # q @ kv^T via dot_general (contract the class dim; no XLU transpose).
        s = lax.dot_general(q, kv, (((1,), (1,)), ((), ())),
                            preferred_element_type=jnp.float32)   # (TM, TK)
        if mask_rows:
            s = jnp.where(kv_valid, s, _NEG_BIG)
        m_new = jnp.maximum(m_ref[...], jnp.max(s, axis=1, keepdims=True))
        corr = jnp.exp(m_ref[...] - m_new)
        p = jnp.exp(s - m_new)                         # padded kv rows underflow to 0
        l_ref[...] = corr * l_ref[...] + jnp.sum(p, axis=1, keepdims=True)
        acc_ref[...] = corr * acc_ref[...] + jnp.dot(
            p.astype(mm_dtype), kv, preferred_element_type=jnp.float32)
        m_ref[...] = m_new

    online_update(qs_ref, ks_ref, m_s, l_s, acc_s)
    online_update(qt_ref, kt_ref, m_t, l_t, acc_t)

    # ---- finalize this query-row tile at the last kv step ------------------
    @pl.when(j == nj - 1)
    def _():
        if mask_cols:
            col = lax.broadcasted_iota(jnp.int32, (1, Cp), 1)
            lane_mask = col < n_cols                   # (1, Cp)
        if mask_rows:
            row = lax.broadcasted_iota(jnp.int32, (TM, 1), 0)
            row_valid = (i * TM + row) < n_rows        # (TM, 1)

        # -- MSE between the two attention maps for these rows ---------------
        # Padded class columns of both maps are exactly 0 (kv columns are
        # zero-padded), so they contribute nothing to the squared-error sum.
        att_s = acc_s[...] * pl.reciprocal(l_s[...])   # exact 1/x (reference parity)
        att_t = acc_t[...] * pl.reciprocal(l_t[...])
        diff = att_s - att_t
        sq = diff * diff
        if mask_rows:
            sq = jnp.where(row_valid, sq, 0.0)
        mse_part = jnp.sum(sq) * (1.0 / (n_rows * n_cols))

        # -- KD KL term on the same query rows --------------------------------
        inv_T = 1.0 / T

        def masked_log_softmax(ref):
            # Fold the 1/T scale and the lane mask into the first read (no
            # full-size f32 copies kept live).
            z = ref[...].astype(jnp.float32) * inv_T
            if mask_cols:
                z = jnp.where(lane_mask, z, _NEG_BIG)
            z = z - jnp.max(z, axis=1, keepdims=True)
            e = jnp.exp(z)                             # padded lanes underflow to 0
            s = jnp.sum(e, axis=1, keepdims=True)
            return z - jnp.log(s), e, s

        log_p_s, _, _ = masked_log_softmax(qs_ref)
        log_p_t, e_t, s_t = masked_log_softmax(qt_ref)
        p_s = log_p_s + 1e-07                          # matches the PyTorch module exactly
        p_t = e_t * pl.reciprocal(s_t)                 # exact; padded lanes stay exactly 0
        # kl_div(p_s, p_t, 'sum') = sum(p_t * (log(p_t) - p_s)); reuse log_p_t.
        kl = p_t * (log_p_t - p_s)                     # padded lanes: 0 * finite = 0
        if mask_rows:
            kl = jnp.where(row_valid, kl, 0.0)
        kl_part = jnp.sum(kl) * (T * T / n_rows)

        part = alpha * kl_part + (1.0 - alpha) * mse_part
        out_ref[...] = part + jnp.zeros_like(out_ref)


def dis_loss(y_s, y_t, T=4.0, alpha=0.5, bf16_matmul=True, row_tile=None):
    """Pallas implementation of Dis(T, alpha).forward(y_s, y_t) for 2-D logits [B, C].

    bf16_matmul: feed the MXU bf16 operands with f32 accumulation (~2-3x faster
    matmuls on all generations; tiny numerics change vs an f32 reference).
    row_tile: optional override of the auto-picked query/kv row tile.
    """
    assert y_s.shape == y_t.shape and y_s.ndim == 2
    B, C = y_s.shape
    itemsize = jnp.dtype(y_s.dtype).itemsize

    # Lane-dense class dim; MXU/VMEM-budgeted row tiles.
    Cp = _round_up(max(C, 128), 128)
    tile = _round_up(row_tile, 8) if row_tile is not None else _pick_row_tile(Cp, itemsize)
    TM = TK = min(tile, _round_up(B, 8))
    Bp = _round_up(B, TM)

    if (Bp, Cp) != (B, C):
        y_s = jnp.pad(y_s, ((0, Bp - B), (0, Cp - C)))
        y_t = jnp.pad(y_t, ((0, Bp - B), (0, Cp - C)))

    num_i = Bp // TM
    num_j = Bp // TK

    kernel = functools.partial(
        _dis_kernel, T=float(T), alpha=float(alpha),
        n_rows=B, n_cols=C, padded_rows=Bp, bf16_matmul=bool(bf16_matmul))

    # Explicit VMEM budget sized to the actual per-step footprint (scoped
    # defaults are 16/32 MiB — well below physical on v5e/v6e).
    footprint = (4 * 2 * TM * Cp * itemsize            # double-buffered input tiles
                 + 2 * TM * Cp * 4 + 4 * TM * 4        # attention-map accumulators + m/l
                 + 8 * TM * TK * 4                     # score/exp temporaries
                 + 2 * 8 * 128 * 4)                    # output block
    vmem_limit = int(min(max(footprint + (8 << 20), 16 << 20), 48 << 20))

    # Advisory cost hint for XLA scheduling around the kernel.
    cost = pl.CostEstimate(
        flops=8 * Bp * Bp * Cp,
        transcendentals=2 * Bp * Bp + 4 * Bp * Cp,
        bytes_accessed=2 * Bp * Cp * itemsize * (1 + num_i) + num_i * 8 * 128 * 4)

    partials = pl.pallas_call(
        kernel,
        out_shape=jax.ShapeDtypeStruct((num_i, 8, 128), jnp.float32),
        grid_spec=pltpu.PrefetchScalarGridSpec(
            num_scalar_prefetch=0,
            grid=(num_i, num_j),                       # kv (reduction) axis last
            in_specs=[
                pl.BlockSpec((TM, Cp), lambda i, j: (i, 0)),   # y_s query rows (resident over j)
                pl.BlockSpec((TM, Cp), lambda i, j: (i, 0)),   # y_t query rows
                pl.BlockSpec((TK, Cp), lambda i, j: (j, 0)),   # y_s kv rows (pipelined)
                pl.BlockSpec((TK, Cp), lambda i, j: (j, 0)),   # y_t kv rows
            ],
            out_specs=pl.BlockSpec((1, 8, 128), lambda i, j: (i, 0, 0)),
            scratch_shapes=[
                pltpu.VMEM((TM, 1), jnp.float32),   # m_s
                pltpu.VMEM((TM, 1), jnp.float32),   # l_s
                pltpu.VMEM((TM, Cp), jnp.float32),  # acc_s
                pltpu.VMEM((TM, 1), jnp.float32),   # m_t
                pltpu.VMEM((TM, 1), jnp.float32),   # l_t
                pltpu.VMEM((TM, Cp), jnp.float32),  # acc_t
            ]),
        compiler_params=pltpu.CompilerParams(
            dimension_semantics=("parallel", "arbitrary"),
            vmem_limit_bytes=vmem_limit),
        cost_estimate=cost,
    )(y_s, y_t, y_s, y_t)

    return jnp.sum(partials[:, 0, 0])


def _dis_reference(y_s, y_t, T, alpha):
    """Pure-JAX reference of the PyTorch module (f32)."""
    log_p_s = jax.nn.log_softmax(y_s / T, axis=1) + 1e-07
    p_t = jax.nn.softmax(y_t / T, axis=1)
    kl = jnp.sum(p_t * (jnp.log(p_t) - log_p_s)) * (T * T) / y_s.shape[0]

    def att(x):
        w = jax.nn.softmax(x @ x.T, axis=-1)
        return w @ x

    mse = jnp.mean((att(y_s) - att(y_t)) ** 2)
    return alpha * kl + (1.0 - alpha) * mse


if __name__ == "__main__":
    key = jax.random.PRNGKey(0)
    k1, k2 = jax.random.split(key)
    # Small, deliberately unaligned shapes: exercises class-lane padding,
    # batch-row padding, and (with row_tile=8) a real (3, 3) tiled grid.
    B, C = 20, 40
    y_s = jax.random.normal(k1, (B, C), dtype=jnp.float32)
    y_t = jax.random.normal(k2, (B, C), dtype=jnp.float32)

    T, alpha = 4.0, 0.5
    loss = dis_loss(y_s, y_t, T=T, alpha=alpha, row_tile=8)
    jax.block_until_ready(loss)

    ref = _dis_reference(y_s, y_t, T, alpha)
    assert jnp.isfinite(loss), float(loss)
    # bf16 MXU operands (f32 accumulation) introduce <1% deviation here.
    assert jnp.allclose(loss, ref, rtol=5e-2, atol=1e-4), (float(loss), float(ref))
    print("KERNEL_OK")
</pallas_src>

<mosaic_0001>
module attributes {stable_mosaic.version = 11 : i64} {
  func.func @_dis_kernel(%arg0: i32, %arg1: i32, %arg2: memref<8x128xf32, #tpu.memory_space<vmem>>, %arg3: memref<8x128xf32, #tpu.memory_space<vmem>>, %arg4: memref<8x128xf32, #tpu.memory_space<vmem>>, %arg5: memref<8x128xf32, #tpu.memory_space<vmem>>, %arg6: memref<1x8x128xf32, #tpu.memory_space<vmem>>, %arg7: memref<8x1xf32, #tpu.memory_space<vmem>>, %arg8: memref<8x1xf32, #tpu.memory_space<vmem>>, %arg9: memref<8x128xf32, #tpu.memory_space<vmem>>, %arg10: memref<8x1xf32, #tpu.memory_space<vmem>>, %arg11: memref<8x1xf32, #tpu.memory_space<vmem>>, %arg12: memref<8x128xf32, #tpu.memory_space<vmem>>) attributes {dimension_semantics = [#tpu.dimension_semantics<parallel>, #tpu.dimension_semantics<arbitrary>], iteration_bounds = array<i64: 3, 3>, scalar_prefetch = 0 : i64, scratch_operands = 6 : i64, tpu.core_type = #tpu.core_type<tc>, window_params = [{transform_indices = @transform_0, window_bounds = array<i64: 8, 128>}, {transform_indices = @transform_1, window_bounds = array<i64: 8, 128>}, {transform_indices = @transform_2, window_bounds = array<i64: 8, 128>}, {transform_indices = @transform_3, window_bounds = array<i64: 8, 128>}, {transform_indices = @transform_4, window_bounds = array<i64: 1, 8, 128>}]} {
    %c0_i32 = arith.constant 0 : i32
    %0 = arith.cmpi eq, %arg1, %c0_i32 : i32
    %1 = arith.extui %0 : i1 to i32
    %c0_i32_0 = arith.constant 0 : i32
    %2 = arith.cmpi ne, %1, %c0_i32_0 : i32
    scf.if %2 {
      %cst_46 = arith.constant -1.000000e+30 : f32
      %78 = vector.broadcast %cst_46 : f32 to vector<8x1xf32>
      %c0_47 = arith.constant 0 : index
      %c0_48 = arith.constant 0 : index
      %79 = vector.load %arg7[%c0_47, %c0_48] : memref<8x1xf32, #tpu.memory_space<vmem>>, vector<8x1xf32>
      tpu.vector_store %arg7[%c0_47, %c0_48], %78 {strides = array<i32>} : memref<8x1xf32, #tpu.memory_space<vmem>>, vector<8x1xf32>,
      %cst_49 = arith.constant -1.000000e+30 : f32
      %80 = vector.broadcast %cst_49 : f32 to vector<8x1xf32>
      %c0_50 = arith.constant 0 : index
      %c0_51 = arith.constant 0 : index
      %81 = vector.load %arg10[%c0_50, %c0_51] : memref<8x1xf32, #tpu.memory_space<vmem>>, vector<8x1xf32>
      tpu.vector_store %arg10[%c0_50, %c0_51], %80 {strides = array<i32>} : memref<8x1xf32, #tpu.memory_space<vmem>>, vector<8x1xf32>,
      %cst_52 = arith.constant 0.000000e+00 : f32
      %82 = vector.broadcast %cst_52 : f32 to vector<8x1xf32>
      %c0_53 = arith.constant 0 : index
      %c0_54 = arith.constant 0 : index
      %83 = vector.load %arg8[%c0_53, %c0_54] : memref<8x1xf32, #tpu.memory_space<vmem>>, vector<8x1xf32>
      tpu.vector_store %arg8[%c0_53, %c0_54], %82 {strides = array<i32>} : memref<8x1xf32, #tpu.memory_space<vmem>>, vector<8x1xf32>,
      %cst_55 = arith.constant 0.000000e+00 : f32
      %84 = vector.broadcast %cst_55 : f32 to vector<8x1xf32>
      %c0_56 = arith.constant 0 : index
      %c0_57 = arith.constant 0 : index
      %85 = vector.load %arg11[%c0_56, %c0_57] : memref<8x1xf32, #tpu.memory_space<vmem>>, vector<8x1xf32>
      tpu.vector_store %arg11[%c0_56, %c0_57], %84 {strides = array<i32>} : memref<8x1xf32, #tpu.memory_space<vmem>>, vector<8x1xf32>,
      %cst_58 = arith.constant 0.000000e+00 : f32
      %86 = vector.broadcast %cst_58 : f32 to vector<8x128xf32>
      %c0_59 = arith.constant 0 : index
      %c0_60 = arith.constant 0 : index
      %87 = vector.load %arg9[%c0_59, %c0_60] : memref<8x128xf32, #tpu.memory_space<vmem>>, vector<8x128xf32>
      tpu.vector_store %arg9[%c0_59, %c0_60], %86 {strides = array<i32>} : memref<8x128xf32, #tpu.memory_space<vmem>>, vector<8x128xf32>,
      %cst_61 = arith.constant 0.000000e+00 : f32
      %88 = vector.broadcast %cst_61 : f32 to vector<8x128xf32>
      %c0_62 = arith.constant 0 : index
      %c0_63 = arith.constant 0 : index
      %89 = vector.load %arg12[%c0_62, %c0_63] : memref<8x128xf32, #tpu.memory_space<vmem>>, vector<8x128xf32>
      tpu.vector_store %arg12[%c0_62, %c0_63], %88 {strides = array<i32>} : memref<8x128xf32, #tpu.memory_space<vmem>>, vector<8x128xf32>,
    } else {
    }
    %3 = tpu.iota {dimensions = array<i32: 1>} : vector<1x8xi32>
    %c8_i32 = arith.constant 8 : i32
    %4 = arith.muli %arg1, %c8_i32 : i32
    %5 = vector.broadcast %4 : i32 to vector<1x8xi32>
    %6 = arith.addi %5, %3 : vector<1x8xi32>
    %c20_i32 = arith.constant 20 : i32
    %7 = vector.broadcast %c20_i32 : i32 to vector<1x8xi32>
    %8 = arith.cmpi slt, %6, %7 : vector<1x8xi32>
    %c0 = arith.constant 0 : index
    %c0_1 = arith.constant 0 : index
    %9 = vector.load %arg2[%c0, %c0_1] : memref<8x128xf32, #tpu.memory_space<vmem>>, vector<8x128xf32>
    %10 = arith.truncf %9 : vector<8x128xf32> to vector<8x128xbf16>
    %c0_2 = arith.constant 0 : index
    %c0_3 = arith.constant 0 : index
    %11 = vector.load %arg4[%c0_2, %c0_3] : memref<8x128xf32, #tpu.memory_space<vmem>>, vector<8x128xf32>
    %12 = arith.truncf %11 : vector<8x128xf32> to vector<8x128xbf16>
    %cst = arith.constant dense<0.000000e+00> : vector<8x8xf32>
    %13 = tpu.matmul %10, %12, %cst {dimension_numbers = #tpu.dot_dimension_numbers<[1], [1], [0], [0], [0, 0, 1, 0], [], []>} : vector<8x128xbf16>, vector<8x128xbf16>, vector<8x8xf32> -> vector<8x8xf32>
    %cst_4 = arith.constant -1.000000e+30 : f32
    %14 = vector.shape_cast %8 : vector<1x8xi1> to vector<1x8xi1>
    %15 = vector.broadcast %14 : vector<1x8xi1> to vector<8x8xi1>
    %16 = vector.broadcast %cst_4 : f32 to vector<8x8xf32>
    %17 = arith.select %15, %13, %16 : vector<8x8xi1>, vector<8x8xf32>
    %c0_5 = arith.constant 0 : index
    %c0_6 = arith.constant 0 : index
    %18 = vector.load %arg7[%c0_5, %c0_6] : memref<8x1xf32, #tpu.memory_space<vmem>>, vector<8x1xf32>
    %cst_7 = arith.constant dense<0xFF800000> : vector<8xf32>
    %19 = vector.multi_reduction <maximumf>, %17, %cst_7 [1] : vector<8x8xf32> to vector<8xf32>
    %20 = vector.shape_cast %19 : vector<8xf32> to vector<8x1xf32>
    %21 = arith.maximumf %18, %20 : vector<8x1xf32>
    %c0_8 = arith.constant 0 : index
    %c0_9 = arith.constant 0 : index
    %22 = vector.load %arg7[%c0_8, %c0_9] : memref<8x1xf32, #tpu.memory_space<vmem>>, vector<8x1xf32>
    %23 = arith.subf %22, %21 : vector<8x1xf32>
    %24 = math.exp %23 : vector<8x1xf32>
    %25 = vector.broadcast %21 : vector<8x1xf32> to vector<8x8xf32>
    %26 = arith.subf %17, %25 : vector<8x8xf32>
    %27 = math.exp %26 : vector<8x8xf32>
    %c0_10 = arith.constant 0 : index
    %c0_11 = arith.constant 0 : index
    %28 = vector.load %arg8[%c0_10, %c0_11] : memref<8x1xf32, #tpu.memory_space<vmem>>, vector<8x1xf32>
    %29 = arith.mulf %24, %28 : vector<8x1xf32>
    %cst_12 = arith.constant dense<0.000000e+00> : vector<8xf32>
    %30 = vector.multi_reduction <add>, %27, %cst_12 [1] : vector<8x8xf32> to vector<8xf32>
    %31 = vector.shape_cast %30 : vector<8xf32> to vector<8x1xf32>
    %32 = arith.addf %29, %31 : vector<8x1xf32>
    %c0_13 = arith.constant 0 : index
    %c0_14 = arith.constant 0 : index
    %33 = vector.load %arg8[%c0_13, %c0_14] : memref<8x1xf32, #tpu.memory_space<vmem>>, vector<8x1xf32>
    tpu.vector_store %arg8[%c0_13, %c0_14], %32 {strides = array<i32>} : memref<8x1xf32, #tpu.memory_space<vmem>>, vector<8x1xf32>,
    %c0_15 = arith.constant 0 : index
    %c0_16 = arith.constant 0 : index
    %34 = vector.load %arg9[%c0_15, %c0_16] : memref<8x128xf32, #tpu.memory_space<vmem>>, vector<8x128xf32>
    %35 = vector.broadcast %24 : vector<8x1xf32> to vector<8x128xf32>
    %36 = arith.mulf %35, %34 : vector<8x128xf32>
    %37 = arith.truncf %27 : vector<8x8xf32> to vector<8x8xbf16>
    %cst_17 = arith.constant dense<0.000000e+00> : vector<8x128xf32>
    %38 = tpu.matmul %37, %12, %cst_17 {dimension_numbers = #tpu.dot_dimension_numbers<[1], [0], [0], [1], [0, 0, 1, 1], [], []>} : vector<8x8xbf16>, vector<8x128xbf16>, vector<8x128xf32> -> vector<8x128xf32>
    %39 = arith.addf %36, %38 : vector<8x128xf32>
    %c0_18 = arith.constant 0 : index
    %c0_19 = arith.constant 0 : index
    %40 = vector.load %arg9[%c0_18, %c0_19] : memref<8x128xf32, #tpu.memory_space<vmem>>, vector<8x128xf32>
    tpu.vector_store %arg9[%c0_18, %c0_19], %39 {strides = array<i32>} : memref<8x128xf32, #tpu.memory_space<vmem>>, vector<8x128xf32>,
    %c0_20 = arith.constant 0 : index
    %c0_21 = arith.constant 0 : index
    %41 = vector.load %arg7[%c0_20, %c0_21] : memref<8x1xf32, #tpu.memory_space<vmem>>, vector<8x1xf32>
    tpu.vector_store %arg7[%c0_20, %c0_21], %21 {strides = array<i32>} : memref<8x1xf32, #tpu.memory_space<vmem>>, vector<8x1xf32>,
    %c0_22 = arith.constant 0 : index
    %c0_23 = arith.constant 0 : index
    %42 = vector.load %arg3[%c0_22, %c0_23] : memref<8x128xf32, #tpu.memory_space<vmem>>, vector<8x128xf32>
    %43 = arith.truncf %42 : vector<8x128xf32> to vector<8x128xbf16>
    %c0_24 = arith.constant 0 : index
    %c0_25 = arith.constant 0 : index
    %44 = vector.load %arg5[%c0_24, %c0_25] : memref<8x128xf32, #tpu.memory_space<vmem>>, vector<8x128xf32>
    %45 = arith.truncf %44 : vector<8x128xf32> to vector<8x128xbf16>
    %cst_26 = arith.constant dense<0.000000e+00> : vector<8x8xf32>
    %46 = tpu.matmul %43, %45, %cst_26 {dimension_numbers = #tpu.dot_dimension_numbers<[1], [1], [0], [0], [0, 0, 1, 0], [], []>} : vector<8x128xbf16>, vector<8x128xbf16>, vector<8x8xf32> -> vector<8x8xf32>
    %cst_27 = arith.constant -1.000000e+30 : f32
    %47 = vector.shape_cast %8 : vector<1x8xi1> to vector<1x8xi1>
    %48 = vector.broadcast %47 : vector<1x8xi1> to vector<8x8xi1>
    %49 = vector.broadcast %cst_27 : f32 to vector<8x8xf32>
    %50 = arith.select %48, %46, %49 : vector<8x8xi1>, vector<8x8xf32>
    %c0_28 = arith.constant 0 : index
    %c0_29 = arith.constant 0 : index
    %51 = vector.load %arg10[%c0_28, %c0_29] : memref<8x1xf32, #tpu.memory_space<vmem>>, vector<8x1xf32>
    %cst_30 = arith.constant dense<0xFF800000> : vector<8xf32>
    %52 = vector.multi_reduction <maximumf>, %50, %cst_30 [1] : vector<8x8xf32> to vector<8xf32>
    %53 = vector.shape_cast %52 : vector<8xf32> to vector<8x1xf32>
    %54 = arith.maximumf %51, %53 : vector<8x1xf32>
    %c0_31 = arith.constant 0 : index
    %c0_32 = arith.constant 0 : index
    %55 = vector.load %arg10[%c0_31, %c0_32] : memref<8x1xf32, #tpu.memory_space<vmem>>, vector<8x1xf32>
    %56 = arith.subf %55, %54 : vector<8x1xf32>
    %57 = math.exp %56 : vector<8x1xf32>
    %58 = vector.broadcast %54 : vector<8x1xf32> to vector<8x8xf32>
    %59 = arith.subf %50, %58 : vector<8x8xf32>
    %60 = math.exp %59 : vector<8x8xf32>
    %c0_33 = arith.constant 0 : index
    %c0_34 = arith.constant 0 : index
    %61 = vector.load %arg11[%c0_33, %c0_34] : memref<8x1xf32, #tpu.memory_space<vmem>>, vector<8x1xf32>
    %62 = arith.mulf %57, %61 : vector<8x1xf32>
    %cst_35 = arith.constant dense<0.000000e+00> : vector<8xf32>
    %63 = vector.multi_reduction <add>, %60, %cst_35 [1] : vector<8x8xf32> to vector<8xf32>
    %64 = vector.shape_cast %63 : vector<8xf32> to vector<8x1xf32>
    %65 = arith.addf %62, %64 : vector<8x1xf32>
    %c0_36 = arith.constant 0 : index
    %c0_37 = arith.constant 0 : index
    %66 = vector.load %arg11[%c0_36, %c0_37] : memref<8x1xf32, #tpu.memory_space<vmem>>, vector<8x1xf32>
    tpu.vector_store %arg11[%c0_36, %c0_37], %65 {strides = array<i32>} : memref<8x1xf32, #tpu.memory_space<vmem>>, vector<8x1xf32>,
    %c0_38 = arith.constant 0 : index
    %c0_39 = arith.constant 0 : index
    %67 = vector.load %arg12[%c0_38, %c0_39] : memref<8x128xf32, #tpu.memory_space<vmem>>, vector<8x128xf32>
    %68 = vector.broadcast %57 : vector<8x1xf32> to vector<8x128xf32>
    %69 = arith.mulf %68, %67 : vector<8x128xf32>
    %70 = arith.truncf %60 : vector<8x8xf32> to vector<8x8xbf16>
    %cst_40 = arith.constant dense<0.000000e+00> : vector<8x128xf32>
    %71 = tpu.matmul %70, %45, %cst_40 {dimension_numbers = #tpu.dot_dimension_numbers<[1], [0], [0], [1], [0, 0, 1, 1], [], []>} : vector<8x8xbf16>, vector<8x128xbf16>, vector<8x128xf32> -> vector<8x128xf32>
    %72 = arith.addf %69, %71 : vector<8x128xf32>
    %c0_41 = arith.constant 0 : index
    %c0_42 = arith.constant 0 : index
    %73 = vector.load %arg12[%c0_41, %c0_42] : memref<8x128xf32, #tpu.memory_space<vmem>>, vector<8x128xf32>
    tpu.vector_store %arg12[%c0_41, %c0_42], %72 {strides = array<i32>} : memref<8x128xf32, #tpu.memory_space<vmem>>, vector<8x128xf32>,
    %c0_43 = arith.constant 0 : index
    %c0_44 = arith.constant 0 : index
    %74 = vector.load %arg10[%c0_43, %c0_44] : memref<8x1xf32, #tpu.memory_space<vmem>>, vector<8x1xf32>
    tpu.vector_store %arg10[%c0_43, %c0_44], %54 {strides = array<i32>} : memref<8x1xf32, #tpu.memory_space<vmem>>, vector<8x1xf32>,
    %c2_i32 = arith.constant 2 : i32
    %75 = arith.cmpi eq, %arg1, %c2_i32 : i32
    %76 = arith.extui %75 : i1 to i32
    %c0_i32_45 = arith.constant 0 : i32
    %77 = arith.cmpi ne, %76, %c0_i32_45 : i32
    scf.if %77 {
      %78 = tpu.iota {dimensions = array<i32: 1>} : vector<1x128xi32>
      %c40_i32 = arith.constant 40 : i32
      %79 = vector.broadcast %c40_i32 : i32 to vector<1x128xi32>
      %80 = arith.cmpi slt, %78, %79 : vector<1x128xi32>
      %81 = tpu.iota {dimensions = array<i32: 0>} : vector<8x1xi32>
      %c8_i32_46 = arith.constant 8 : i32
      %82 = arith.muli %arg0, %c8_i32_46 : i32
      %83 = vector.broadcast %82 : i32 to vector<8x1xi32>
      %84 = arith.addi %83, %81 : vector<8x1xi32>
      %c20_i32_47 = arith.constant 20 : i32
      %85 = vector.broadcast %c20_i32_47 : i32 to vector<8x1xi32>
      %86 = arith.cmpi slt, %84, %85 : vector<8x1xi32>
      %c0_48 = arith.constant 0 : index
      %c0_49 = arith.constant 0 : index
      %87 = vector.load %arg9[%c0_48, %c0_49] : memref<8x128xf32, #tpu.memory_space<vmem>>, vector<8x128xf32>
      %c0_50 = arith.constant 0 : index
      %c0_51 = arith.constant 0 : index
      %88 = vector.load %arg8[%c0_50, %c0_51] : memref<8x1xf32, #tpu.memory_space<vmem>>, vector<8x1xf32>
      %89 = tpu.reciprocal %88 : vector<8x1xf32> -> vector<8x1xf32>
      %90 = vector.broadcast %89 : vector<8x1xf32> to vector<8x128xf32>
      %91 = arith.mulf %87, %90 : vector<8x128xf32>
      %c0_52 = arith.constant 0 : index
      %c0_53 = arith.constant 0 : index
      %92 = vector.load %arg12[%c0_52, %c0_53] : memref<8x128xf32, #tpu.memory_space<vmem>>, vector<8x128xf32>
      %c0_54 = arith.constant 0 : index
      %c0_55 = arith.constant 0 : index
      %93 = vector.load %arg11[%c0_54, %c0_55] : memref<8x1xf32, #tpu.memory_space<vmem>>, vector<8x1xf32>
      %94 = tpu.reciprocal %93 : vector<8x1xf32> -> vector<8x1xf32>
      %95 = vector.broadcast %94 : vector<8x1xf32> to vector<8x128xf32>
      %96 = arith.mulf %92, %95 : vector<8x128xf32>
      %97 = arith.subf %91, %96 : vector<8x128xf32>
      %98 = arith.mulf %97, %97 : vector<8x128xf32>
      %cst_56 = arith.constant 0.000000e+00 : f32
      %99 = vector.shape_cast %86 : vector<8x1xi1> to vector<8x1xi1>
      %100 = vector.broadcast %99 : vector<8x1xi1> to vector<8x128xi1>
      %101 = vector.broadcast %cst_56 : f32 to vector<8x128xf32>
      %102 = arith.select %100, %98, %101 : vector<8x128xi1>, vector<8x128xf32>
      %103 = vector.shape_cast %102 : vector<8x128xf32> to vector<1x8x128xf32>
      %cst_57 = arith.constant dense<0.000000e+00> : vector<1xf32>
      %104 = vector.multi_reduction <add>, %103, %cst_57 [1, 2] : vector<1x8x128xf32> to vector<1xf32>
      %105 = vector.shape_cast %104 : vector<1xf32> to vector<1x1x1xf32>
      %106 = vector.extract %105[0, 0, 0] : f32 from vector<1x1x1xf32>
      %cst_58 = arith.constant 1.250000e-03 : f32
      %107 = arith.mulf %106, %cst_58 : f32
      %c0_59 = arith.constant 0 : index
      %c0_60 = arith.constant 0 : index
      %108 = vector.load %arg2[%c0_59, %c0_60] : memref<8x128xf32, #tpu.memory_space<vmem>>, vector<8x128xf32>
      %cst_61 = arith.constant 2.500000e-01 : f32
      %109 = vector.broadcast %cst_61 : f32 to vector<8x128xf32>
      %110 = arith.mulf %108, %109 : vector<8x128xf32>
      %cst_62 = arith.constant -1.000000e+30 : f32
      %111 = vector.shape_cast %80 : vector<1x128xi1> to vector<1x128xi1>
      %112 = vector.broadcast %111 : vector<1x128xi1> to vector<8x128xi1>
      %113 = vector.broadcast %cst_62 : f32 to vector<8x128xf32>
      %114 = arith.select %112, %110, %113 : vector<8x128xi1>, vector<8x128xf32>
      %cst_63 = arith.constant dense<0xFF800000> : vector<8xf32>
      %115 = vector.multi_reduction <maximumf>, %114, %cst_63 [1] : vector<8x128xf32> to vector<8xf32>
      %116 = vector.shape_cast %115 : vector<8xf32> to vector<8x1xf32>
      %117 = vector.broadcast %116 : vector<8x1xf32> to vector<8x128xf32>
      %118 = arith.subf %114, %117 : vector<8x128xf32>
      %119 = math.exp %118 : vector<8x128xf32>
      %cst_64 = arith.constant dense<0.000000e+00> : vector<8xf32>
      %120 = vector.multi_reduction <add>, %119, %cst_64 [1] : vector<8x128xf32> to vector<8xf32>
      %121 = vector.shape_cast %120 : vector<8xf32> to vector<8x1xf32>
      %122 = math.log %121 : vector<8x1xf32>
      %123 = vector.broadcast %122 : vector<8x1xf32> to vector<8x128xf32>
      %124 = arith.subf %118, %123 : vector<8x128xf32>
      %c0_65 = arith.constant 0 : index
      %c0_66 = arith.constant 0 : index
      %125 = vector.load %arg3[%c0_65, %c0_66] : memref<8x128xf32, #tpu.memory_space<vmem>>, vector<8x128xf32>
      %cst_67 = arith.constant 2.500000e-01 : f32
      %126 = vector.broadcast %cst_67 : f32 to vector<8x128xf32>
      %127 = arith.mulf %125, %126 : vector<8x128xf32>
      %cst_68 = arith.constant -1.000000e+30 : f32
      %128 = vector.shape_cast %80 : vector<1x128xi1> to vector<1x128xi1>
      %129 = vector.broadcast %128 : vector<1x128xi1> to vector<8x128xi1>
      %130 = vector.broadcast %cst_68 : f32 to vector<8x128xf32>
      %131 = arith.select %129, %127, %130 : vector<8x128xi1>, vector<8x128xf32>
      %cst_69 = arith.constant dense<0xFF800000> : vector<8xf32>
      %132 = vector.multi_reduction <maximumf>, %131, %cst_69 [1] : vector<8x128xf32> to vector<8xf32>
      %133 = vector.shape_cast %132 : vector<8xf32> to vector<8x1xf32>
      %134 = vector.broadcast %133 : vector<8x1xf32> to vector<8x128xf32>
      %135 = arith.subf %131, %134 : vector<8x128xf32>
      %136 = math.exp %135 : vector<8x128xf32>
      %cst_70 = arith.constant dense<0.000000e+00> : vector<8xf32>
      %137 = vector.multi_reduction <add>, %136, %cst_70 [1] : vector<8x128xf32> to vector<8xf32>
      %138 = vector.shape_cast %137 : vector<8xf32> to vector<8x1xf32>
      %139 = math.log %138 : vector<8x1xf32>
      %140 = vector.broadcast %139 : vector<8x1xf32> to vector<8x128xf32>
      %141 = arith.subf %135, %140 : vector<8x128xf32>
      %cst_71 = arith.constant 1.000000e-07 : f32
      %142 = vector.broadcast %cst_71 : f32 to vector<8x128xf32>
      %143 = arith.addf %124, %142 : vector<8x128xf32>
      %144 = tpu.reciprocal %138 : vector<8x1xf32> -> vector<8x1xf32>
      %145 = vector.broadcast %144 : vector<8x1xf32> to vector<8x128xf32>
      %146 = arith.mulf %136, %145 : vector<8x128xf32>
      %147 = arith.subf %141, %143 : vector<8x128xf32>
      %148 = arith.mulf %146, %147 : vector<8x128xf32>
      %cst_72 = arith.constant 0.000000e+00 : f32
      %149 = vector.shape_cast %86 : vector<8x1xi1> to vector<8x1xi1>
      %150 = vector.broadcast %149 : vector<8x1xi1> to vector<8x128xi1>
      %151 = vector.broadcast %cst_72 : f32 to vector<8x128xf32>
      %152 = arith.select %150, %148, %151 : vector<8x128xi1>, vector<8x128xf32>
      %153 = vector.shape_cast %152 : vector<8x128xf32> to vector<1x8x128xf32>
      %cst_73 = arith.constant dense<0.000000e+00> : vector<1xf32>
      %154 = vector.multi_reduction <add>, %153, %cst_73 [1, 2] : vector<1x8x128xf32> to vector<1xf32>
      %155 = vector.shape_cast %154 : vector<1xf32> to vector<1x1x1xf32>
      %156 = vector.extract %155[0, 0, 0] : f32 from vector<1x1x1xf32>
      %cst_74 = arith.constant 8.000000e-01 : f32
      %157 = arith.mulf %156, %cst_74 : f32
      %cst_75 = arith.constant 5.000000e-01 : f32
      %158 = arith.mulf %cst_75, %157 : f32
      %cst_76 = arith.constant 5.000000e-01 : f32
      %159 = arith.mulf %cst_76, %107 : f32
      %160 = arith.addf %158, %159 : f32
      %cst_77 = arith.constant 0.000000e+00 : f32
      %161 = vector.broadcast %cst_77 : f32 to vector<1x8x128xf32>
      %162 = vector.broadcast %160 : f32 to vector<1x8x128xf32>
      %163 = arith.addf %162, %161 : vector<1x8x128xf32>
      %c0_78 = arith.constant 0 : index
      %c0_79 = arith.constant 0 : index
      %c0_80 = arith.constant 0 : index
      %164 = vector.load %arg6[%c0_78, %c0_79, %c0_80] : memref<1x8x128xf32, #tpu.memory_space<vmem>>, vector<1x8x128xf32>
      tpu.vector_store %arg6[%c0_78, %c0_79, %c0_80], %163 {strides = array<i32>} : memref<1x8x128xf32, #tpu.memory_space<vmem>>, vector<1x8x128xf32>,
    } else {
    }
    return
  }
  func.func @transform_0(%arg0: i32, %arg1: i32) -> (i32, i32) {
    %c0_i32 = arith.constant 0 : i32
    %c0_i32_0 = arith.constant 0 : i32
    return %arg0, %c0_i32 : i32, i32
  }
  func.func @transform_1(%arg0: i32, %arg1: i32) -> (i32, i32) {
    %c0_i32 = arith.constant 0 : i32
    %c0_i32_0 = arith.constant 0 : i32
    return %arg0, %c0_i32 : i32, i32
  }
  func.func @transform_2(%arg0: i32, %arg1: i32) -> (i32, i32) {
    %c0_i32 = arith.constant 0 : i32
    %c0_i32_0 = arith.constant 0 : i32
    return %arg1, %c0_i32 : i32, i32
  }
  func.func @transform_3(%arg0: i32, %arg1: i32) -> (i32, i32) {
    %c0_i32 = arith.constant 0 : i32
    %c0_i32_0 = arith.constant 0 : i32
    return %arg1, %c0_i32 : i32, i32
  }
  func.func @transform_4(%arg0: i32, %arg1: i32) -> (i32, i32, i32) {
    %c0_i32 = arith.constant 0 : i32
    %c0_i32_0 = arith.constant 0 : i32
    %c0_i32_1 = arith.constant 0 : i32
    return %arg0, %c0_i32, %c0_i32_0 : i32, i32, i32
  }
}

</mosaic_0001>

<llo_original>
// kernel: tpu_custom_call.1
$region0: #{tpu_custom_call.1}
  #allocation0 [shape = 'u32[]', space=smem, size = 0x4, offset = 0x4, fixed_abs, tag = 'smem constant byte address 0x4 - core index']
  #allocation1 [shape = 'u32[72,128]{1,0:T(1,128)}', space=vmem, size = 0x9000, scoped, tag = 'internal scratch']
  #allocation2 [shape = 'f32[8,1]{1,0:T(8,128)}', space=vmem, size = 0x1000, scoped, tag = 'scratch operand']
  #allocation3 [shape = 'f32[8,1]{1,0:T(8,128)}', space=vmem, size = 0x1000, scoped, tag = 'scratch operand']
  #allocation4 [shape = 'f32[8,128]{1,0:T(8,128)}', space=vmem, size = 0x1000, scoped, tag = 'scratch operand']
  #allocation5 [shape = 'f32[8,1]{1,0:T(8,128)}', space=vmem, size = 0x1000, scoped, tag = 'scratch operand']
  #allocation6 [shape = 'f32[8,1]{1,0:T(8,128)}', space=vmem, size = 0x1000, scoped, tag = 'scratch operand']
  #allocation7 [shape = 'f32[8,128]{1,0:T(8,128)}', space=vmem, size = 0x1000, scoped, tag = 'scratch operand']
  %s0 = inlined_call_operand.hbm [shape: f32[24,128], index: 0, kind: input, shape index: {}]
  %s1 = inlined_call_operand.hbm [shape: f32[24,128], index: 1, kind: input, shape index: {}]
  %s2 = inlined_call_operand.hbm [shape: f32[24,128], index: 2, kind: input, shape index: {}]
  %s3 = inlined_call_operand.hbm [shape: f32[24,128], index: 3, kind: input, shape index: {}]
  %s4 = inlined_call_operand.hbm [shape: f32[3,8,128], index: 4, kind: output, shape index: {}]
  %s5 = sld [smem:[#allocation0]]
  $region73: #{tpu_custom_call.1} parent=0
    _
  %s7 = ssub.s32 1, %s5
  %s8 = scalar_select 0, %s7, %s5
  $region1: #{tpu_custom_call.1} parent=0
    #allocation8 [shape = 'u8[8192]{0}', space=vmem, size = 0x2000, scoped, tag = 'input window, operand 0']
    #allocation9 [shape = 's32[2]{0}', space=sflag, size = 0x8, scoped, tag = 'scoped memory for tpu_custom_call.1']
    #allocation10 [shape = 's32[2]{0}', space=sflag, size = 0x8, scoped, tag = 'scoped memory for tpu_custom_call.1']
    #allocation11 [shape = 'u8[8192]{0}', space=vmem, size = 0x2000, scoped, tag = 'input window, operand 1']
    #allocation12 [shape = 's32[2]{0}', space=sflag, size = 0x8, scoped, tag = 'scoped memory for tpu_custom_call.1']
    #allocation13 [shape = 'u8[8192]{0}', space=vmem, size = 0x2000, scoped, tag = 'input window, operand 2']
    #allocation14 [shape = 'u8[8192]{0}', space=vmem, size = 0x2000, scoped, tag = 'input window, operand 3']
    #allocation15 [shape = 's32[2]{0}', space=sflag, size = 0x8, scoped, tag = 'scoped memory for tpu_custom_call.1']
    #allocation16 [shape = 'u8[8192]{0}', space=vmem, size = 0x2000, scoped, tag = 'output window, operand 0']
    %9 = vsyncpa [#allocation9], 0
    %s10 = scalar_lea.sflag [#allocation9], 1
    %11 = vsyncpa %s10, 0
    %12 = vsyncpa [#allocation12], 0
    %s13 = scalar_lea.sflag [#allocation12], 1
    %14 = vsyncpa %s13, 0
    %15 = vsyncpa [#allocation15], 0
    %s16 = scalar_lea.sflag [#allocation15], 1
    %17 = vsyncpa %s16, 0
    %18 = vsyncpa [#allocation10], 0
    %s19 = scalar_lea.sflag [#allocation10], 1
    %20 = vsyncpa %s19, 0
    loop: start=0, step=1, limit=11
    $region2: #{tpu_custom_call.1} parent=1 // loop_pre_header
      _
    $region3: #{tpu_custom_call.1} parent=1 // loop_header
      %s22 = sphi 0, %s26
      %p23 = scmp.ge.s32.totalorder %s22, 11
      %s29 = sphi 0, %s41
      %s30 = sphi 0, %s37
      %s31 = sphi 0, %s29
      %s32 = sphi 0, %s30
      %s33 = sphi 0, %s31
      %s34 = sphi 0, %s32
      %s44 = sphi 0, %s46
      %s47 = sphi 0, %s44
      %s48 = sphi 0, %s47
      %s64 = sphi 0, %s48
      %s70 = sphi 0, %s72
      %s73 = sphi 0, %s70
      %s74 = sphi 0, %s73
      %s90 = sphi 0, %s74
      %s96 = sphi 0, %s98
      %s99 = sphi 0, %s96
      %s100 = sphi 0, %s99
      %s116 = sphi 0, %s100
      %s122 = sphi 0, %s124
      %s125 = sphi 0, %s122
      %s126 = sphi 0, %s125
      %s142 = sphi 0, %s126
      %s148 = sphi 0, %s150
      %s151 = sphi 0, %s148
      %s152 = sphi 0, %s151
      %s168 = sphi 0, %s152
    $region4: #{tpu_custom_call.1} parent=1 // loop_header_branch
      %25 = sbr.rel (%p23) target = $region8
    $region5: #{tpu_custom_call.1} parent=1 // loop_body
      %s27 = ssub.s32 %s22, 1
      %s28 = ssub.s32 %s22, 2
      %s35 = sadd.s32 1, %s30
      %p36 = scmp.ge.s32.totalorder %s35, 3
      %s37 = scalar_select %p36, 0, %s35
      %s38 = sadd.s32 1, %s29
      %s39 = scalar_select %p36, %s38, %s29
      %p40 = scmp.ge.s32.totalorder %s39, 3
      %s41 = scalar_select %p40, 0, %s39
      %s42 = ssub.s32 %s29, %s41
      %p43 = scmp.eq.s32.totalorder %s42, 0
      %s45 = sadd.s32 %s44, 1
      %s46 = scalar_select %p43, %s44, %s45
      %p49 = pneg %p43
      %p50 = scmp.eq.s32.totalorder %s22, 8
      %p51 = por %p49, %p50
      %p52 = scmp.ne.s32.totalorder %s44, %s47
      %p53 = scmp.eq.s32.totalorder %s22, 0
      %p54 = por %p52, %p53
      %p55 = scmp.ne.s32.totalorder %s44, %s47
      %p56 = scmp.eq.s32.totalorder %s27, 8
      %p57 = por %p55, %p56
      %p58 = scmp.ne.s32.totalorder %s47, %s48
      %p59 = scmp.eq.s32.totalorder %s27, 0
      %p60 = por %p58, %p59
      %p61 = scmp.ne.s32.totalorder %s47, %s48
      %p62 = scmp.eq.s32.totalorder %s28, 8
      %p63 = por %p61, %p62
      %p65 = scmp.ne.s32.totalorder %s48, %s64
      %p66 = scmp.eq.s32.totalorder %s28, 0
      %p67 = por %p65, %p66
      %s68 = ssub.s32 %s29, %s41
      %p69 = scmp.eq.s32.totalorder %s68, 0
      %s71 = sadd.s32 %s70, 1
      %s72 = scalar_select %p69, %s70, %s71
      %p75 = pneg %p69
      %p76 = scmp.eq.s32.totalorder %s22, 8
      %p77 = por %p75, %p76
      %p78 = scmp.ne.s32.totalorder %s70, %s73
      %p79 = scmp.eq.s32.totalorder %s22, 0
      %p80 = por %p78, %p79
      %p81 = scmp.ne.s32.totalorder %s70, %s73
      %p82 = scmp.eq.s32.totalorder %s27, 8
      %p83 = por %p81, %p82
      %p84 = scmp.ne.s32.totalorder %s73, %s74
      %p85 = scmp.eq.s32.totalorder %s27, 0
      %p86 = por %p84, %p85
      %p87 = scmp.ne.s32.totalorder %s73, %s74
      %p88 = scmp.eq.s32.totalorder %s28, 8
      %p89 = por %p87, %p88
      %p91 = scmp.ne.s32.totalorder %s74, %s90
      %p92 = scmp.eq.s32.totalorder %s28, 0
      %p93 = por %p91, %p92
      %s94 = ssub.s32 %s30, %s37
      %p95 = scmp.eq.s32.totalorder %s94, 0
      %s97 = sadd.s32 %s96, 1
      %s98 = scalar_select %p95, %s96, %s97
      %p101 = pneg %p95
      %p102 = scmp.eq.s32.totalorder %s22, 8
      %p103 = por %p101, %p102
      %p104 = scmp.ne.s32.totalorder %s96, %s99
      %p105 = scmp.eq.s32.totalorder %s22, 0
      %p106 = por %p104, %p105
      %p107 = scmp.ne.s32.totalorder %s96, %s99
      %p108 = scmp.eq.s32.totalorder %s27, 8
      %p109 = por %p107, %p108
      %p110 = scmp.ne.s32.totalorder %s99, %s100
      %p111 = scmp.eq.s32.totalorder %s27, 0
      %p112 = por %p110, %p111
      %p113 = scmp.ne.s32.totalorder %s99, %s100
      %p114 = scmp.eq.s32.totalorder %s28, 8
      %p115 = por %p113, %p114
      %p117 = scmp.ne.s32.totalorder %s100, %s116
      %p118 = scmp.eq.s32.totalorder %s28, 0
      %p119 = por %p117, %p118
      %s120 = ssub.s32 %s30, %s37
      %p121 = scmp.eq.s32.totalorder %s120, 0
      %s123 = sadd.s32 %s122, 1
      %s124 = scalar_select %p121, %s122, %s123
      %p127 = pneg %p121
      %p128 = scmp.eq.s32.totalorder %s22, 8
      %p129 = por %p127, %p128
      %p130 = scmp.ne.s32.totalorder %s122, %s125
      %p131 = scmp.eq.s32.totalorder %s22, 0
      %p132 = por %p130, %p131
      %p133 = scmp.ne.s32.totalorder %s122, %s125
      %p134 = scmp.eq.s32.totalorder %s27, 8
      %p135 = por %p133, %p134
      %p136 = scmp.ne.s32.totalorder %s125, %s126
      %p137 = scmp.eq.s32.totalorder %s27, 0
      %p138 = por %p136, %p137
      %p139 = scmp.ne.s32.totalorder %s125, %s126
      %p140 = scmp.eq.s32.totalorder %s28, 8
      %p141 = por %p139, %p140
      %p143 = scmp.ne.s32.totalorder %s126, %s142
      %p144 = scmp.eq.s32.totalorder %s28, 0
      %p145 = por %p143, %p144
      %s146 = ssub.s32 %s29, %s41
      %p147 = scmp.eq.s32.totalorder %s146, 0
      %s149 = sadd.s32 %s148, 1
      %s150 = scalar_select %p147, %s148, %s149
      %p153 = pneg %p147
      %p154 = scmp.eq.s32.totalorder %s22, 8
      %p155 = por %p153, %p154
      %p156 = scmp.ne.s32.totalorder %s148, %s151
      %p157 = scmp.eq.s32.totalorder %s22, 0
      %p158 = por %p156, %p157
      %p159 = scmp.ne.s32.totalorder %s148, %s151
      %p160 = scmp.eq.s32.totalorder %s27, 8
      %p161 = por %p159, %p160
      %p162 = scmp.ne.s32.totalorder %s151, %s152
      %p163 = scmp.eq.s32.totalorder %s27, 0
      %p164 = por %p162, %p163
      %p165 = scmp.ne.s32.totalorder %s151, %s152
      %p166 = scmp.eq.s32.totalorder %s28, 8
      %p167 = por %p165, %p166
      %p169 = scmp.ne.s32.totalorder %s152, %s168
      %p170 = scmp.eq.s32.totalorder %s28, 0
      %p171 = por %p169, %p170
      %p172 = scmp.le.s32.totalorder 1, %s22
      %p173 = scmp.lt.s32.totalorder %s22, 10
      %p174 = pnand %p172, %p173
      %p175 = pneg %p174
      // Predicated region
      $region9: #{tpu_custom_call.1} parent=5 // pred_check
        _
      $region10: #{tpu_custom_call.1} parent=5 // pred_check_branch
        %177 = sbr.rel (%p174) target = $region12
      $region11: #{tpu_custom_call.1} parent=5 // pred_region
        %s178 = ssub.s32 %s22, 1
      $region12: #{tpu_custom_call.1} parent=5 // pred_fallthru
        _
      %p179 = scmp.lt.s32.totalorder %s22, 9
      // Predicated region
      $region13: #{tpu_custom_call.1} parent=5 // pred_check
        %p180 = pneg %p179
      $region14: #{tpu_custom_call.1} parent=5 // pred_check_branch
        %182 = sbr.rel (%p180) target = $region16
      $region15: #{tpu_custom_call.1} parent=5 // pred_region
        // Predicated region
        $region17: #{tpu_custom_call.1} parent=15 // pred_check
          %p183 = pneg %p54
        $region18: #{tpu_custom_call.1} parent=15 // pred_check_branch
          %185 = sbr.rel (%p183) target = $region20
        $region19: #{tpu_custom_call.1} parent=15 // pred_region
          %s186 = sand.u32 %s44, 1
          %s187 = scalar_lea.sflag [#allocation9], %s186
          %s188 = sand.u32 %s44, 1
          %s189 = smul.addr %s188, 8
          %s190 = scalar_lea.vmem [#allocation8], %s189
          %192 = vsyncadd %s187, 0
          %s193 = smul.addr %s29, 8
          %s194 = scalar_lea.hbm %s0, %s193
          %s196 = sshll.u32 %s194, 4
          %s197 = int_to_ptr.hbm [resolvable:$true] %s196
          %s198 = sshll.u32 %s190, 4
          %s199 = int_to_ptr.vmem [resolvable:$true] %s198
          %201 = dma.hbm_to_vmem [thread:$0]  %s197, 128, %s199, %s187
        $region20: #{tpu_custom_call.1} parent=15 // pred_fallthru
          _
        // Predicated region
        $region21: #{tpu_custom_call.1} parent=15 // pred_check
          %p202 = pneg %p80
        $region22: #{tpu_custom_call.1} parent=15 // pred_check_branch
          %204 = sbr.rel (%p202) target = $region24
        $region23: #{tpu_custom_call.1} parent=15 // pred_region
          %s205 = sand.u32 %s22, 1
          %s206 = scalar_lea.sflag [#allocation12], %s205
          %s207 = sand.u32 %s70, 1
          %s208 = smul.addr %s207, 8
          %s209 = scalar_lea.vmem [#allocation11], %s208
          %211 = vsyncadd %s206, 0
          %s212 = smul.addr %s29, 8
          %s213 = scalar_lea.hbm %s1, %s212
          %s215 = sshll.u32 %s213, 4
          %s216 = int_to_ptr.hbm [resolvable:$true] %s215
          %s217 = sshll.u32 %s209, 4
          %s218 = int_to_ptr.vmem [resolvable:$true] %s217
          %220 = dma.hbm_to_vmem [thread:$0]  %s216, 128, %s218, %s206
        $region24: #{tpu_custom_call.1} parent=15 // pred_fallthru
          _
        // Predicated region
        $region25: #{tpu_custom_call.1} parent=15 // pred_check
          %p221 = pneg %p106
        $region26: #{tpu_custom_call.1} parent=15 // pred_check_branch
          %223 = sbr.rel (%p221) target = $region28
        $region27: #{tpu_custom_call.1} parent=15 // pred_region
          %s224 = sand.u32 %s22, 1
          %s225 = scalar_lea.sflag [#allocation12], %s224
          %s226 = sand.u32 %s96, 1
          %s227 = smul.addr %s226, 8
          %s228 = scalar_lea.vmem [#allocation13], %s227
          %230 = vsyncadd %s225, 0
          %s231 = smul.addr %s30, 8
          %s232 = scalar_lea.hbm %s2, %s231
          %s234 = sshll.u32 %s232, 4
          %s235 = int_to_ptr.hbm [resolvable:$true] %s234
          %s236 = sshll.u32 %s228, 4
          %s237 = int_to_ptr.vmem [resolvable:$true] %s236
          %239 = dma.hbm_to_vmem [thread:$0]  %s235, 128, %s237, %s225
        $region28: #{tpu_custom_call.1} parent=15 // pred_fallthru
          _
        // Predicated region
        $region29: #{tpu_custom_call.1} parent=15 // pred_check
          %p240 = pneg %p132
        $region30: #{tpu_custom_call.1} parent=15 // pred_check_branch
          %242 = sbr.rel (%p240) target = $region32
        $region31: #{tpu_custom_call.1} parent=15 // pred_region
          %s243 = sand.u32 %s122, 1
          %s244 = scalar_lea.sflag [#allocation15], %s243
          %s245 = sand.u32 %s122, 1
          %s246 = smul.addr %s245, 8
          %s247 = scalar_lea.vmem [#allocation14], %s246
          %249 = vsyncadd %s244, 0
          %s250 = smul.addr %s30, 8
          %s251 = scalar_lea.hbm %s3, %s250
          %s253 = sshll.u32 %s251, 4
          %s254 = int_to_ptr.hbm [resolvable:$true] %s253
          %s255 = sshll.u32 %s247, 4
          %s256 = int_to_ptr.vmem [resolvable:$true] %s255
          %258 = dma.hbm_to_vmem [thread:$0]  %s254, 128, %s256, %s244
        $region32: #{tpu_custom_call.1} parent=15 // pred_fallthru
          _
      $region16: #{tpu_custom_call.1} parent=5 // pred_fallthru
        _
      %p259 = scmp.le.s32.totalorder 1, %s22
      %p260 = scmp.lt.s32.totalorder %s22, 10
      %p261 = pnand %p259, %p260
      %p262 = pneg %p261
      // Predicated region
      $region33: #{tpu_custom_call.1} parent=5 // pred_check
        _
      $region34: #{tpu_custom_call.1} parent=5 // pred_check_branch
        %264 = sbr.rel (%p261) target = $region36
      $region35: #{tpu_custom_call.1} parent=5 // pred_region
        %s265 = ssub.s32 %s22, 1
        %s266 = sand.u32 %s47, 1
        %s267 = scalar_lea.sflag [#allocation9], %s266
        %s268 = sand.u32 %s47, 1
        %s269 = smul.addr %s268, 8
        %s270 = scalar_lea.vmem [#allocation8], %s269
        // Predicated region
        $region37: #{tpu_custom_call.1} parent=35 // pred_check
          %p271 = pneg %p60
        $region38: #{tpu_custom_call.1} parent=35 // pred_check_branch
          %273 = sbr.rel (%p271) target = $region40
        $region39: #{tpu_custom_call.1} parent=35 // pred_region
          %275 = dma.done %s267, 128
        $region40: #{tpu_custom_call.1} parent=35 // pred_fallthru
          _
        %s276 = sand.u32 %s27, 1
        %s277 = scalar_lea.sflag [#allocation12], %s276
        %s278 = sand.u32 %s73, 1
        %s279 = smul.addr %s278, 8
        %s280 = scalar_lea.vmem [#allocation11], %s279
        // Predicated region
        $region41: #{tpu_custom_call.1} parent=35 // pred_check
          %p281 = pneg %p86
        $region42: #{tpu_custom_call.1} parent=35 // pred_check_branch
          %283 = sbr.rel (%p281) target = $region44
        $region43: #{tpu_custom_call.1} parent=35 // pred_region
          %285 = dma.done %s277, 128
        $region44: #{tpu_custom_call.1} parent=35 // pred_fallthru
          _
        %s286 = sand.u32 %s27, 1
        %s287 = scalar_lea.sflag [#allocation12], %s286
        %s288 = sand.u32 %s99, 1
        %s289 = smul.addr %s288, 8
        %s290 = scalar_lea.vmem [#allocation13], %s289
        // Predicated region
        $region45: #{tpu_custom_call.1} parent=35 // pred_check
          %p291 = pneg %p112
        $region46: #{tpu_custom_call.1} parent=35 // pred_check_branch
          %293 = sbr.rel (%p291) target = $region48
        $region47: #{tpu_custom_call.1} parent=35 // pred_region
          %295 = dma.done %s287, 128
        $region48: #{tpu_custom_call.1} parent=35 // pred_fallthru
          _
        %s296 = sand.u32 %s125, 1
        %s297 = scalar_lea.sflag [#allocation15], %s296
        %s298 = sand.u32 %s125, 1
        %s299 = smul.addr %s298, 8
        %s300 = scalar_lea.vmem [#allocation14], %s299
        // Predicated region
        $region49: #{tpu_custom_call.1} parent=35 // pred_check
          %p301 = pneg %p138
        $region50: #{tpu_custom_call.1} parent=35 // pred_check_branch
          %303 = sbr.rel (%p301) target = $region52
        $region51: #{tpu_custom_call.1} parent=35 // pred_region
          %305 = dma.done %s297, 128
        $region52: #{tpu_custom_call.1} parent=35 // pred_fallthru
          _
        %s306 = sand.u32 %s47, 1
        %s307 = scalar_lea.sflag [#allocation9], %s306
        %s308 = sand.u32 %s47, 1
        %s309 = smul.addr %s308, 8
        %s310 = scalar_lea.vmem [#allocation8], %s309
        %p311 = pneg %p60
        %p312 = pneg %p57
        %s313 = sand.u32 %s27, 1
        %s314 = scalar_lea.sflag [#allocation12], %s313
        %s315 = sand.u32 %s73, 1
        %s316 = smul.addr %s315, 8
        %s317 = scalar_lea.vmem [#allocation11], %s316
        %p318 = pneg %p86
        %p319 = pneg %p83
        %s320 = sand.u32 %s27, 1
        %s321 = scalar_lea.sflag [#allocation12], %s320
        %s322 = sand.u32 %s99, 1
        %s323 = smul.addr %s322, 8
        %s324 = scalar_lea.vmem [#allocation13], %s323
        %p325 = pneg %p112
        %p326 = pneg %p109
        %s327 = sand.u32 %s125, 1
        %s328 = scalar_lea.sflag [#allocation15], %s327
        %s329 = sand.u32 %s125, 1
        %s330 = smul.addr %s329, 8
        %s331 = scalar_lea.vmem [#allocation14], %s330
        %p332 = pneg %p138
        %p333 = pneg %p135
        %p334 = pneg %p164
        %p335 = pneg %p161
        %s336 = sand.u32 %s151, 1
        %s337 = scalar_lea.sflag [#allocation10], %s336
        %s338 = sand.u32 %s151, 1
        %s339 = smul.addr %s338, 8
        %s340 = scalar_lea.vmem [#allocation16], %s339
        %p342 = scmp.eq.s32.totalorder %s32, 0
        // Predicated region
        $region53: #{tpu_custom_call.1} parent=35 // pred_check
          %p343 = pneg %p342
        $region54: #{tpu_custom_call.1} parent=35 // pred_check_branch
          %345 = sbr.rel (%p343) target = $region56
        $region55: #{tpu_custom_call.1} parent=35 // pred_region
          %vm346 = vcmask 7168
          %347 = vst.msk [vmem:[#allocation2] sm:$0xff] %vm346, -1e+30
          %348 = vst.msk [vmem:[#allocation5] sm:$0xff] %vm346, -1e+30
          %349 = vst.msk [vmem:[#allocation3] sm:$0xff] %vm346, 0.0
          %350 = vst.msk [vmem:[#allocation6] sm:$0xff] %vm346, 0.0
          %351 = vst [vmem:[#allocation4] sm:$0xff] 0.0
          %352 = vst [vmem:[#allocation7] sm:$0xff] 0.0
        $region56: #{tpu_custom_call.1} parent=35 // pred_fallthru
          _
        %v353 = vlaneseq
        %v354 = vand.u32 %v353, 127
        %s355 = smul.u32 %s32, 8
        %v356 = vstv %s355
        %v357 = vadd.s32 %v356, %v354
        %vm358 = vcmp.lt.s32.totalorder %v357, 20
        %v359 = vld [vmem:[%s270] sm:$0xff]
        %v360 = vpack.c.bf16 %v359, %v359
        %v361 = vld [vmem:[%s290] sm:$0xff]
        %v362 = vpack.c.bf16 %v361, %v361
        %363 = vmatpush.bf16.xpose.msra.mxu0 0
        %364 = vmatpush.bf16.xpose.msra.mxu0 0
        %365 = vmatpush.bf16.xpose.msra.mxu0 0
        %366 = vmatpush.bf16.xpose.msra.mxu0 0
        %367 = vmatpush.bf16.xpose.msra.mxu0 0
        %368 = vmatpush.bf16.xpose.msra.mxu0 0
        %369 = vmatpush.bf16.xpose.msra.mxu0 0
        %370 = vmatpush.bf16.xpose.msra.mxu0 %v362
        %371 = vmatmul.bf16.gmra.mxu0 %v360
        %v372 = vpop.f32.mrf.mxu0
        %v373 = vadd.f32 0.0, %v372
        %v374 = vpop.f32.mrf.mxu0
        %375 = vdwg.mxu0
        %v376 = vsel %vm358, 1, 0
        %vm377 = vcmp.eq.s32.totalorder %v376, 1
        %v378 = vsel %vm377, %v373, -1e+30
        %v379 = vld [vmem:[#allocation2] sm:$0xff]
        %vm380 = vcmask 64512
        %v381 = vsel %vm380, %v378, -inf
        %382 = vmax.xlane.f32.xlu0 %v381
        %v383 = vpop.xlane.xlu0 %382
        %v384 = vmax.f32 %v379, %v383
        %v385 = vsub.f32 %v379, %v384
        %v386 = vmul.f32 %v385, 1.442695
        %v387 = vpow.pop %v386
        %389 = vset.pattern.permute.xlu0 0
        %390 = vperm.xlu0 %389, %v384
        %v391 = vpop.permute.xlu0 %390
        %v393 = vsub.f32 %v378, %v391
        %v394 = vmul.f32 %v393, 1.442695
        %v395 = vpow.pop %v394
        %v396 = vld [vmem:[#allocation3] sm:$0xff]
        %v397 = vmul.f32 %v387, %v396
        %v398 = vsel %vm380, %v395, 0.0
        %399 = vadd.xlane.f32.xlu0 %v398
        %v400 = vpop.xlane.xlu0 %399
        %v401 = vadd.f32 %v397, %v400
        %vm402 = vcmask 7168
        %403 = vst.msk [vmem:[#allocation3] sm:$0xff] %vm402, %v401
        %v404 = vld [vmem:[#allocation4] sm:$0xff]
        %406 = vset.pattern.permute.xlu0 0
        %407 = vperm.xlu0 %406, %v387
        %v408 = vpop.permute.xlu0 %407
        %v410 = vmul.f32 %v408, %v404
        %v411 = vpack.c.bf16 %v395, %v395
        %v413 = vsel %vm380, %v411, 0
        %vm415 = vcmask 1043456
        %v417 = vsel %vm415, %v362, 0
        %419 = vmatpush.bf16.msra.mxu0 0
        %420 = vmatpush.bf16.msra.mxu0 0
        %421 = vmatpush.bf16.msra.mxu0 0
        %422 = vmatpush.bf16.msra.mxu0 0
        %423 = vmatpush.bf16.msra.mxu0 0
        %424 = vmatpush.bf16.msra.mxu0 0
        %425 = vmatpush.bf16.msra.mxu0 0
        %426 = vmatpush.bf16.msra.mxu0 %v417
        %427 = vmatmul.bf16.gmra.mxu0 %v413
        %v428 = vpop.f32.mrf.mxu0
        %v429 = vadd.f32 0.0, %v428
        %v430 = vpop.f32.mrf.mxu0
        %431 = vdwg.mxu0
        %v432 = vadd.f32 %v410, %v429
        %433 = vst [vmem:[#allocation4] sm:$0xff] %v432
        %434 = vst.msk [vmem:[#allocation2] sm:$0xff] %vm402, %v384
        %v435 = vld [vmem:[%s280] sm:$0xff]
        %v436 = vpack.c.bf16 %v435, %v435
        %v437 = vld [vmem:[%s300] sm:$0xff]
        %v438 = vpack.c.bf16 %v437, %v437
        %439 = vmatpush.bf16.xpose.msra.mxu0 0
        %440 = vmatpush.bf16.xpose.msra.mxu0 0
        %441 = vmatpush.bf16.xpose.msra.mxu0 0
        %442 = vmatpush.bf16.xpose.msra.mxu0 0
        %443 = vmatpush.bf16.xpose.msra.mxu0 0
        %444 = vmatpush.bf16.xpose.msra.mxu0 0
        %445 = vmatpush.bf16.xpose.msra.mxu0 0
        %446 = vmatpush.bf16.xpose.msra.mxu0 %v438
        %447 = vmatmul.bf16.gmra.mxu0 %v436
        %v448 = vpop.f32.mrf.mxu0
        %v449 = vadd.f32 0.0, %v448
        %v450 = vpop.f32.mrf.mxu0
        %451 = vdwg.mxu0
        %v452 = vsel %vm377, %v449, -1e+30
        %v453 = vld [vmem:[#allocation5] sm:$0xff]
        %v454 = vsel %vm380, %v452, -inf
        %455 = vmax.xlane.f32.xlu0 %v454
        %v456 = vpop.xlane.xlu0 %455
        %v457 = vmax.f32 %v453, %v456
        %v458 = vsub.f32 %v453, %v457
        %v459 = vmul.f32 %v458, 1.442695
        %v460 = vpow.pop %v459
        %462 = vset.pattern.permute.xlu0 0
        %463 = vperm.xlu0 %462, %v457
        %v464 = vpop.permute.xlu0 %463
        %v466 = vsub.f32 %v452, %v464
        %v467 = vmul.f32 %v466, 1.442695
        %v468 = vpow.pop %v467
        %v469 = vld [vmem:[#allocation6] sm:$0xff]
        %v470 = vmul.f32 %v460, %v469
        %v471 = vsel %vm380, %v468, 0.0
        %472 = vadd.xlane.f32.xlu0 %v471
        %v473 = vpop.xlane.xlu0 %472
        %v474 = vadd.f32 %v470, %v473
        %475 = vst.msk [vmem:[#allocation6] sm:$0xff] %vm402, %v474
        %v476 = vld [vmem:[#allocation7] sm:$0xff]
        %478 = vset.pattern.permute.xlu0 0
        %479 = vperm.xlu0 %478, %v460
        %v480 = vpop.permute.xlu0 %479
        %v482 = vmul.f32 %v480, %v476
        %v483 = vpack.c.bf16 %v468, %v468
        %v485 = vsel %vm380, %v483, 0
        %v488 = vsel %vm415, %v438, 0
        %490 = vmatpush.bf16.msra.mxu0 0
        %491 = vmatpush.bf16.msra.mxu0 0
        %492 = vmatpush.bf16.msra.mxu0 0
        %493 = vmatpush.bf16.msra.mxu0 0
        %494 = vmatpush.bf16.msra.mxu0 0
        %495 = vmatpush.bf16.msra.mxu0 0
        %496 = vmatpush.bf16.msra.mxu0 0
        %497 = vmatpush.bf16.msra.mxu0 %v488
        %498 = vmatmul.bf16.gmra.mxu0 %v485
        %v499 = vpop.f32.mrf.mxu0
        %v500 = vadd.f32 0.0, %v499
        %v501 = vpop.f32.mrf.mxu0
        %502 = vdwg.mxu0
        %v503 = vadd.f32 %v482, %v500
        %504 = vst [vmem:[#allocation7] sm:$0xff] %v503
        %505 = vst.msk [vmem:[#allocation5] sm:$0xff] %vm402, %v457
        %p506 = scmp.eq.s32.totalorder %s32, 2
        // Predicated region
        $region57: #{tpu_custom_call.1} parent=35 // pred_check
          %p507 = pneg %p506
        $region58: #{tpu_custom_call.1} parent=35 // pred_check_branch
          %509 = sbr.rel (%p507) target = $region60
        $region59: #{tpu_custom_call.1} parent=35 // pred_region
          %vm510 = vcmp.lt.s32.totalorder %v354, 40
          %v511 = vlaneseq
          %v512 = vshrl.u32 %v511, 7
          %s513 = smul.u32 %s31, 8
          %v514 = vstv %s513
          %v515 = vadd.s32 %v514, %v512
          %vm516 = vcmp.lt.s32.totalorder %v515, 20
          %v517 = vld [vmem:[#allocation4] sm:$0xff]
          %v518 = vld [vmem:[#allocation3] sm:$0xff]
          %v519 = vrcp.pop %v518
          %v520 = vmul.f32 %v518, %v519
          %v521 = vsub.f32 1.0, %v520
          %v522 = vmul.f32 %v519, %v521
          %v523 = vadd.f32 %v519, %v522
          %vm524 = vweird.f32 %v518
          %vm525 = vweird.f32 %v519
          %vm526 = vmor %vm524, %vm525
          %v527 = vsel %vm526, %v519, %v523
          %v528 = vand.u32 2147483647, %v518
          %vm529 = vcmp.eq.f32.partialorder %v528, 8.507059e+37
          %v530 = vand.u32 %v518, 2147483648
          %v531 = vor.u32 1.1754944e-38, %v530
          %v532 = vsel %vm529, %v531, %v527
          %534 = vset.pattern.permute.xlu0 0
          %535 = vperm.xlu0 %534, %v532
          %v536 = vpop.permute.xlu0 %535
          %v538 = vmul.f32 %v517, %v536
          %v539 = vld [vmem:[#allocation7] sm:$0xff]
          %v540 = vld [vmem:[#allocation6] sm:$0xff]
          %v541 = vrcp.pop %v540
          %v542 = vmul.f32 %v540, %v541
          %v543 = vsub.f32 1.0, %v542
          %v544 = vmul.f32 %v541, %v543
          %v545 = vadd.f32 %v541, %v544
          %vm546 = vweird.f32 %v540
          %vm547 = vweird.f32 %v541
          %vm548 = vmor %vm546, %vm547
          %v549 = vsel %vm548, %v541, %v545
          %v550 = vand.u32 2147483647, %v540
          %vm551 = vcmp.eq.f32.partialorder %v550, 8.507059e+37
          %v552 = vand.u32 %v540, 2147483648
          %v553 = vor.u32 1.1754944e-38, %v552
          %v554 = vsel %vm551, %v553, %v549
          %556 = vset.pattern.permute.xlu0 0
          %557 = vperm.xlu0 %556, %v554
          %v558 = vpop.permute.xlu0 %557
          %v560 = vmul.f32 %v539, %v558
          %v561 = vsub.f32 %v538, %v560
          %v562 = vmul.f32 %v561, %v561
          %v563 = vsel %vm516, 1, 0
          %vm564 = vcmp.eq.s32.totalorder %v563, 1
          %v565 = vsel %vm564, %v562, 0.0
          %566 = vadd.xlane.f32.xlu0 %v565
          %v567 = vpop.xlane.xlu0 %566
          %v568 = vrot.slane %v567, 4
          %v569 = vadd.f32 %v567, %v568
          %v570 = vrot.slane %v569, 2
          %v571 = vadd.f32 %v569, %v570
          %v572 = vrot.slane %v571, 1
          %v573 = vadd.f32 %v571, %v572
          %s574 = vtos %v573
          %s575 = smul.f32 %s574, 0.00125
          %v576 = vld [vmem:[%s270] sm:$0xff]
          %v577 = vmul.f32 %v576, 0.25
          %v578 = vsel %vm510, 1, 0
          %vm579 = vcmp.eq.s32.totalorder %v578, 1
          %v580 = vsel %vm579, %v577, -1e+30
          %581 = vmax.xlane.f32.xlu0 %v580
          %v582 = vpop.xlane.xlu0 %581
          %v583 = vsub.f32 %v580, %v582
          %v584 = vmul.f32 %v583, 1.442695
          %v585 = vpow.pop %v584
          %586 = vadd.xlane.f32.xlu0 %v585
          %v587 = vpop.xlane.xlu0 %586
          %v588 = vlog2.pop %v587
          %v589 = vmul.f32 %v588, 0.6931472
          %v590 = vsub.f32 %v583, %v589
          %v591 = vld [vmem:[%s280] sm:$0xff]
          %v592 = vmul.f32 %v591, 0.25
          %v593 = vsel %vm579, %v592, -1e+30
          %594 = vmax.xlane.f32.xlu0 %v593
          %v595 = vpop.xlane.xlu0 %594
          %v596 = vsub.f32 %v593, %v595
          %v597 = vmul.f32 %v596, 1.442695
          %v598 = vpow.pop %v597
          %599 = vadd.xlane.f32.xlu0 %v598
          %v600 = vpop.xlane.xlu0 %599
          %v601 = vlog2.pop %v600
          %v602 = vmul.f32 %v601, 0.6931472
          %v603 = vsub.f32 %v596, %v602
          %v604 = vadd.f32 %v590, 1e-07
          %v605 = vrcp.pop %v600
          %v606 = vmul.f32 %v600, %v605
          %v607 = vsub.f32 1.0, %v606
          %v608 = vmul.f32 %v605, %v607
          %v609 = vadd.f32 %v605, %v608
          %vm610 = vweird.f32 %v600
          %vm611 = vweird.f32 %v605
          %vm612 = vmor %vm610, %vm611
          %v613 = vsel %vm612, %v605, %v609
          %v614 = vand.u32 2147483647, %v600
          %vm615 = vcmp.eq.f32.partialorder %v614, 8.507059e+37
          %v616 = vand.u32 %v600, 2147483648
          %v617 = vor.u32 1.1754944e-38, %v616
          %v618 = vsel %vm615, %v617, %v613
          %v619 = vmul.f32 %v598, %v618
          %v620 = vsub.f32 %v603, %v604
          %v621 = vmul.f32 %v619, %v620
          %v622 = vsel %vm564, %v621, 0.0
          %623 = vadd.xlane.f32.xlu0 %v622
          %v624 = vpop.xlane.xlu0 %623
          %v625 = vrot.slane %v624, 4
          %v626 = vadd.f32 %v624, %v625
          %v627 = vrot.slane %v626, 2
          %v628 = vadd.f32 %v626, %v627
          %v629 = vrot.slane %v628, 1
          %v630 = vadd.f32 %v628, %v629
          %s631 = vtos %v630
          %s632 = smul.f32 %s631, 0.8
          %s633 = smul.f32 %s632, 0.5
          %s634 = smul.f32 %s575, 0.5
          %s635 = sadd.f32 %s633, %s634
          %v636 = vstv %s635
          %v637 = vadd.f32 %v636, 0.0
          %638 = vst [vmem:[%s340] sm:$0xff] %v637
        $region60: #{tpu_custom_call.1} parent=35 // pred_fallthru
          _
        %s639 = sand.u32 %s151, 1
        %s640 = scalar_lea.sflag [#allocation10], %s639
        %s641 = sand.u32 %s151, 1
        %s642 = smul.addr %s641, 8
        %s643 = scalar_lea.vmem [#allocation16], %s642
        // Predicated region
        $region61: #{tpu_custom_call.1} parent=35 // pred_check
          %p644 = pneg %p161
        $region62: #{tpu_custom_call.1} parent=35 // pred_check_branch
          %646 = sbr.rel (%p644) target = $region64
        $region63: #{tpu_custom_call.1} parent=35 // pred_region
          %648 = vsyncadd %s640, 0
          %s649 = smul.addr %s31, 8
          %s650 = scalar_lea.hbm %s4, %s649
          %s652 = sshll.u32 %s643, 4
          %s653 = int_to_ptr.vmem [resolvable:$true] %s652
          %s654 = sshll.u32 %s650, 4
          %s655 = int_to_ptr.hbm [resolvable:$true] %s654
          %657 = dma.vmem_to_hbm [thread:$0]  %s653, 128, %s655, %s640
        $region64: #{tpu_custom_call.1} parent=35 // pred_fallthru
          _
      $region36: #{tpu_custom_call.1} parent=5 // pred_fallthru
        _
      %p658 = scmp.le.s32.totalorder 2, %s22
      // Predicated region
      $region65: #{tpu_custom_call.1} parent=5 // pred_check
        %p659 = pneg %p658
      $region66: #{tpu_custom_call.1} parent=5 // pred_check_branch
        %661 = sbr.rel (%p659) target = $region68
      $region67: #{tpu_custom_call.1} parent=5 // pred_region
        %s662 = ssub.s32 %s22, 2
        // Predicated region
        $region69: #{tpu_custom_call.1} parent=67 // pred_check
          %p663 = pneg %p167
        $region70: #{tpu_custom_call.1} parent=67 // pred_check_branch
          %665 = sbr.rel (%p663) target = $region72
        $region71: #{tpu_custom_call.1} parent=67 // pred_region
          %s666 = sand.u32 %s152, 1
          %s667 = scalar_lea.sflag [#allocation10], %s666
          %s668 = sand.u32 %s152, 1
          %s669 = smul.addr %s668, 8
          %s670 = scalar_lea.vmem [#allocation16], %s669
          %672 = dma.done %s667, 128
        $region72: #{tpu_custom_call.1} parent=67 // pred_fallthru
          _
      $region68: #{tpu_custom_call.1} parent=5 // pred_fallthru
        _
    $region6: #{tpu_custom_call.1} parent=1 // loop_footer
      %s26 = sadd.s32 1, %s22
    $region7: #{tpu_custom_call.1} parent=1 // loop_footer_branch
      %21 = sbr.rel target = $region3
    $region8: #{tpu_custom_call.1} parent=1 // loop_exit
      _
    %673 = vsyncpa [#allocation9], 1
    %s674 = scalar_lea.sflag [#allocation9], 1
    %675 = vsyncpa %s674, 1
    %676 = vsyncpa [#allocation12], 1
    %s677 = scalar_lea.sflag [#allocation12], 1
    %678 = vsyncpa %s677, 1
    %679 = vsyncpa [#allocation15], 1
    %s680 = scalar_lea.sflag [#allocation15], 1
    %681 = vsyncpa %s680, 1
    %682 = vsyncpa [#allocation10], 1
    %s683 = scalar_lea.sflag [#allocation10], 1
    %684 = vsyncpa %s683, 1

</llo_original>
